<compile_context>
chip_gen: v7x
topology: tpu7x:2x2x1
jax: 0.10.0
libtpu: 0.0.40
codegen_flags: <defaults>
</compile_context>

<pallas_src>
import math
from functools import partial

import jax
import jax.numpy as jnp
from jax import lax
from jax.experimental import pallas as pl
from jax.experimental.pallas import tpu as pltpu

_LANE = 128                     # lane width: channel dims padded to this
_SUBLANE = 8
_SQRT_2_OVER_PI = math.sqrt(2.0 / math.pi)
_INV_SQRT_2 = 1.0 / math.sqrt(2.0)


def _gelu(x, exact):
    if exact:
        # PyTorch nn.GELU() default (erf formulation) — long VPU polynomial.
        return 0.5 * x * (1.0 + lax.erf(x * _INV_SQRT_2))
    # tanh approximation — transcendental goes to the EUP (otherwise-idle bundle slot).
    return 0.5 * x * (1.0 + jnp.tanh(_SQRT_2_OVER_PI * (x + 0.044715 * x * x * x)))


def _mlp_kernel(x_ref, w1_ref, b1_ref, w2_ref, b2_ref, o_ref, *, exact_gelu):
    # x_ref:  (tm, Cin_p)    bf16 token tile
    # w1_ref: (Cin_p, H_p)   bf16, resident (single-buffered)
    # b1_ref: (1, H_p)       f32
    # w2_ref: (H_p, Cout_p)  bf16, resident
    # b2_ref: (1, Cout_p)    f32
    # o_ref:  (tm, Cout_p)
    h = jnp.dot(x_ref[...], w1_ref[...], preferred_element_type=jnp.float32)
    h = h + b1_ref[...]                   # bias + GELU kept in f32
    h = _gelu(h, exact_gelu)
    # TODO(synk): dropout is elided — drop=0.0 (module default) makes it an identity.
    y = jnp.dot(h.astype(w2_ref.dtype), w2_ref[...], preferred_element_type=jnp.float32)
    y = y + b2_ref[...]
    o_ref[...] = y.astype(o_ref.dtype)


def _pad_axis(a, axis, mult):
    pad = (-a.shape[axis]) % mult
    if pad == 0:
        return a
    widths = [(0, 0)] * a.ndim
    widths[axis] = (0, pad)
    return jnp.pad(a, widths)


def prepare_mlp_params(w1, b1, w2, b2, compute_dtype=jnp.bfloat16):
    """One-time param prep (call OUTSIDE the per-step path): pad channel dims to the
    128-lane width, transpose PyTorch (out,in) weights to input-major, cast to bf16."""
    w1p = _pad_axis(_pad_axis(w1, 1, _LANE), 0, _LANE)      # (H_p, Cin_p)
    w2p = _pad_axis(_pad_axis(w2, 1, _LANE), 0, _LANE)      # (Cout_p, H_p)
    w1_t = jnp.transpose(w1p).astype(compute_dtype)         # (Cin_p, H_p)
    w2_t = jnp.transpose(w2p).astype(compute_dtype)         # (H_p, Cout_p)
    b1_r = _pad_axis(b1, 0, _LANE).astype(jnp.float32).reshape(1, -1)
    b2_r = _pad_axis(b2, 0, _LANE).astype(jnp.float32).reshape(1, -1)
    return (w1_t, b1_r, w2_t, b2_r), int(w2.shape[0])       # true C_out for final slice


def mlp_pallas_prepared(x, params, c_out, *, tm=256, exact_gelu=False,
                        compute_dtype=jnp.bfloat16):
    w1_t, b1_r, w2_t, b2_r = params
    N, C_in = x.shape
    Cin_p, H_p = w1_t.shape
    Cout_p = w2_t.shape[1]
    out_dtype = x.dtype

    # Pad tokens to the tile and channels to the lane width; cast matmul operand to bf16.
    x_p = _pad_axis(_pad_axis(x.astype(compute_dtype), 1, _LANE), 0, tm)
    assert x_p.shape[1] == Cin_p, "x channel dim must match fc1 in_features"
    N_p = x_p.shape[0]
    grid = (N_p // tm,)

    isz_c = jnp.dtype(compute_dtype).itemsize
    isz_o = jnp.dtype(out_dtype).itemsize
    # VMEM budget: 2x-buffered x/out tiles + single-buffered weights + f32 hidden intermediate.
    vmem_est = (2 * tm * Cin_p * isz_c
                + 2 * tm * Cout_p * isz_o
                + (Cin_p * H_p + H_p * Cout_p) * isz_c
                + (H_p + Cout_p) * 4 * _SUBLANE
                + 2 * tm * H_p * 4)
    vmem_limit = int(min(max(2 * vmem_est, 32 * 1024 * 1024), 56 * 1024 * 1024))

    cost = pl.CostEstimate(
        flops=2 * N_p * (Cin_p * H_p + H_p * Cout_p),
        transcendentals=N_p * H_p,
        bytes_accessed=(x_p.size * isz_c
                        + (Cin_p * H_p + H_p * Cout_p) * isz_c
                        + (H_p + Cout_p) * 4
                        + N_p * Cout_p * isz_o),
    )

    resident = dict(pipeline_mode=pl.Buffered(1))   # constant index_map -> no double-buffer
    out = pl.pallas_call(
        partial(_mlp_kernel, exact_gelu=exact_gelu),
        out_shape=jax.ShapeDtypeStruct((N_p, Cout_p), out_dtype),
        grid_spec=pltpu.PrefetchScalarGridSpec(
            num_scalar_prefetch=0,
            grid=grid,
            in_specs=[
                pl.BlockSpec((tm, Cin_p), lambda i: (i, 0)),
                pl.BlockSpec((Cin_p, H_p), lambda i: (0, 0), **resident),
                pl.BlockSpec((1, H_p), lambda i: (0, 0), **resident),
                pl.BlockSpec((H_p, Cout_p), lambda i: (0, 0), **resident),
                pl.BlockSpec((1, Cout_p), lambda i: (0, 0), **resident),
            ],
            out_specs=pl.BlockSpec((tm, Cout_p), lambda i: (i, 0)),
        ),
        compiler_params=pltpu.CompilerParams(
            dimension_semantics=("parallel",),
            vmem_limit_bytes=vmem_limit),
        cost_estimate=cost,
    )(x_p, w1_t, b1_r, w2_t, b2_r)

    return out[:N, :c_out]


def mlp_pallas(x, w1, b1, w2, b2, *, tm=256, exact_gelu=False,
               compute_dtype=jnp.bfloat16):
    """x: (N, C_in); w1: (H, C_in); b1: (H,); w2: (C_out, H); b2: (C_out,)
    (PyTorch nn.Linear (out_features, in_features) convention)."""
    params, c_out = prepare_mlp_params(w1, b1, w2, b2, compute_dtype)
    return mlp_pallas_prepared(x, params, c_out, tm=tm, exact_gelu=exact_gelu,
                               compute_dtype=compute_dtype)


def mlp_reference(x, w1, b1, w2, b2):
    h = x @ w1.T + b1
    h = 0.5 * h * (1.0 + lax.erf(h * _INV_SQRT_2))
    return h @ w2.T + b2


if __name__ == "__main__":
    # Small shapes consistent with the module: N tokens, in=16, hidden=32, out=16.
    N, C_in, H, C_out = 64, 16, 32, 16
    key = jax.random.PRNGKey(0)
    kx, k1, k2, k3, k4 = jax.random.split(key, 5)

    x = jax.random.normal(kx, (N, C_in), dtype=jnp.float32)

    # Deterministic init mimicking nn.Linear default (uniform in +-1/sqrt(fan_in)).
    lim1 = 1.0 / math.sqrt(C_in)
    lim2 = 1.0 / math.sqrt(H)
    w1 = jax.random.uniform(k1, (H, C_in), minval=-lim1, maxval=lim1, dtype=jnp.float32)
    b1 = jax.random.uniform(k2, (H,), minval=-lim1, maxval=lim1, dtype=jnp.float32)
    w2 = jax.random.uniform(k3, (C_out, H), minval=-lim2, maxval=lim2, dtype=jnp.float32)
    b2 = jax.random.uniform(k4, (C_out,), minval=-lim2, maxval=lim2, dtype=jnp.float32)

    out = mlp_pallas(x, w1, b1, w2, b2)
    out = jax.block_until_ready(out)

    ref = mlp_reference(x, w1, b1, w2, b2)
    assert out.shape == (N, C_out)
    # bf16 matmul operands + tanh-approx GELU vs exact-erf f32 reference -> relaxed tolerance.
    max_err = float(jnp.max(jnp.abs(out - ref)))
    assert max_err < 3e-2, f"mismatch vs reference (max abs err {max_err})"

    print("KERNEL_OK")
</pallas_src>

<mosaic_0001>
module attributes {stable_mosaic.version = 11 : i64} {
  func.func @_mlp_kernel(%arg0: i32, %arg1: memref<256x128xbf16, #tpu.memory_space<vmem>>, %arg2: memref<128x128xbf16, #tpu.memory_space<vmem>>, %arg3: memref<1x128xf32, #tpu.memory_space<vmem>>, %arg4: memref<128x128xbf16, #tpu.memory_space<vmem>>, %arg5: memref<1x128xf32, #tpu.memory_space<vmem>>, %arg6: memref<256x128xf32, #tpu.memory_space<vmem>>) attributes {dimension_semantics = [#tpu.dimension_semantics<parallel>], iteration_bounds = array<i64: 1>, scalar_prefetch = 0 : i64, scratch_operands = 0 : i64, tpu.core_type = #tpu.core_type<tc>, window_params = [{transform_indices = @transform_0, window_bounds = array<i64: 256, 128>}, {pipeline_mode = #tpu.pipeline_mode<synchronous>, transform_indices = @transform_1, window_bounds = array<i64: 128, 128>}, {pipeline_mode = #tpu.pipeline_mode<synchronous>, transform_indices = @transform_2, window_bounds = array<i64: 1, 128>}, {pipeline_mode = #tpu.pipeline_mode<synchronous>, transform_indices = @transform_3, window_bounds = array<i64: 128, 128>}, {pipeline_mode = #tpu.pipeline_mode<synchronous>, transform_indices = @transform_4, window_bounds = array<i64: 1, 128>}, {transform_indices = @transform_5, window_bounds = array<i64: 256, 128>}]} {
    %c0 = arith.constant 0 : index
    %c0_0 = arith.constant 0 : index
    %0 = vector.load %arg1[%c0, %c0_0] : memref<256x128xbf16, #tpu.memory_space<vmem>>, vector<256x128xbf16>
    %c0_1 = arith.constant 0 : index
    %c0_2 = arith.constant 0 : index
    %1 = vector.load %arg2[%c0_1, %c0_2] : memref<128x128xbf16, #tpu.memory_space<vmem>>, vector<128x128xbf16>
    %cst = arith.constant dense<0.000000e+00> : vector<256x128xf32>
    %2 = tpu.matmul %0, %1, %cst {dimension_numbers = #tpu.dot_dimension_numbers<[1], [0], [0], [1], [0, 0, 1, 1], [], []>} : vector<256x128xbf16>, vector<128x128xbf16>, vector<256x128xf32> -> vector<256x128xf32>
    %c0_3 = arith.constant 0 : index
    %c0_4 = arith.constant 0 : index
    %3 = vector.load %arg3[%c0_3, %c0_4] : memref<1x128xf32, #tpu.memory_space<vmem>>, vector<1x128xf32>
    %4 = vector.broadcast %3 : vector<1x128xf32> to vector<256x128xf32>
    %5 = arith.addf %2, %4 : vector<256x128xf32>
    %cst_5 = arith.constant 5.000000e-01 : f32
    %6 = vector.broadcast %cst_5 : f32 to vector<256x128xf32>
    %7 = arith.mulf %6, %5 : vector<256x128xf32>
    %cst_6 = arith.constant 4.471500e-02 : f32
    %8 = vector.broadcast %cst_6 : f32 to vector<256x128xf32>
    %9 = arith.mulf %8, %5 : vector<256x128xf32>
    %10 = arith.mulf %9, %5 : vector<256x128xf32>
    %11 = arith.mulf %10, %5 : vector<256x128xf32>
    %12 = arith.addf %5, %11 : vector<256x128xf32>
    %cst_7 = arith.constant 0.797884583 : f32
    %13 = vector.broadcast %cst_7 : f32 to vector<256x128xf32>
    %14 = arith.mulf %13, %12 : vector<256x128xf32>
    %15 = math.tanh %14 : vector<256x128xf32>
    %cst_8 = arith.constant 1.000000e+00 : f32
    %16 = vector.broadcast %cst_8 : f32 to vector<256x128xf32>
    %17 = arith.addf %16, %15 : vector<256x128xf32>
    %18 = arith.mulf %7, %17 : vector<256x128xf32>
    %19 = arith.truncf %18 : vector<256x128xf32> to vector<256x128xbf16>
    %c0_9 = arith.constant 0 : index
    %c0_10 = arith.constant 0 : index
    %20 = vector.load %arg4[%c0_9, %c0_10] : memref<128x128xbf16, #tpu.memory_space<vmem>>, vector<128x128xbf16>
    %cst_11 = arith.constant dense<0.000000e+00> : vector<256x128xf32>
    %21 = tpu.matmul %19, %20, %cst_11 {dimension_numbers = #tpu.dot_dimension_numbers<[1], [0], [0], [1], [0, 0, 1, 1], [], []>} : vector<256x128xbf16>, vector<128x128xbf16>, vector<256x128xf32> -> vector<256x128xf32>
    %c0_12 = arith.constant 0 : index
    %c0_13 = arith.constant 0 : index
    %22 = vector.load %arg5[%c0_12, %c0_13] : memref<1x128xf32, #tpu.memory_space<vmem>>, vector<1x128xf32>
    %23 = vector.broadcast %22 : vector<1x128xf32> to vector<256x128xf32>
    %24 = arith.addf %21, %23 : vector<256x128xf32>
    %c0_14 = arith.constant 0 : index
    %c0_15 = arith.constant 0 : index
    %25 = vector.load %arg6[%c0_14, %c0_15] : memref<256x128xf32, #tpu.memory_space<vmem>>, vector<256x128xf32>
    tpu.vector_store %arg6[%c0_14, %c0_15], %24 {strides = array<i32>} : memref<256x128xf32, #tpu.memory_space<vmem>>, vector<256x128xf32>,
    return
  }
  func.func @transform_0(%arg0: i32) -> (i32, i32) {
    %c0_i32 = arith.constant 0 : i32
    %c0_i32_0 = arith.constant 0 : i32
    return %arg0, %c0_i32 : i32, i32
  }
  func.func @transform_1(%arg0: i32) -> (i32, i32) {
    %c0_i32 = arith.constant 0 : i32
    %c0_i32_0 = arith.constant 0 : i32
    %c0_i32_1 = arith.constant 0 : i32
    return %c0_i32, %c0_i32_0 : i32, i32
  }
  func.func @transform_2(%arg0: i32) -> (i32, i32) {
    %c0_i32 = arith.constant 0 : i32
    %c0_i32_0 = arith.constant 0 : i32
    %c0_i32_1 = arith.constant 0 : i32
    return %c0_i32, %c0_i32_0 : i32, i32
  }
  func.func @transform_3(%arg0: i32) -> (i32, i32) {
    %c0_i32 = arith.constant 0 : i32
    %c0_i32_0 = arith.constant 0 : i32
    %c0_i32_1 = arith.constant 0 : i32
    return %c0_i32, %c0_i32_0 : i32, i32
  }
  func.func @transform_4(%arg0: i32) -> (i32, i32) {
    %c0_i32 = arith.constant 0 : i32
    %c0_i32_0 = arith.constant 0 : i32
    %c0_i32_1 = arith.constant 0 : i32
    return %c0_i32, %c0_i32_0 : i32, i32
  }
  func.func @transform_5(%arg0: i32) -> (i32, i32) {
    %c0_i32 = arith.constant 0 : i32
    %c0_i32_0 = arith.constant 0 : i32
    return %arg0, %c0_i32 : i32, i32
  }
}

</mosaic_0001>

<llo_original>
// kernel: tpu_custom_call.1
$region0: #{tpu_custom_call.1}
  #allocation0 [shape = 'u32[]', space=smem, size = 0x4, offset = 0x4, fixed_abs, tag = 'smem constant byte address 0x4 - core index']
  #allocation1 [shape = 'u32[144,128]{1,0:T(1,128)}', space=vmem, size = 0x12000, scoped, tag = 'internal scratch']
  %s0 = inlined_call_operand.hbm [shape: bf16[256,128], index: 0, kind: input, shape index: {}]
  %s1 = inlined_call_operand.hbm [shape: bf16[128,128], index: 1, kind: input, shape index: {}]
  %s2 = inlined_call_operand.vmem [shape: f32[1,128], index: 2, kind: input, shape index: {}]
  %s3 = inlined_call_operand.hbm [shape: bf16[128,128], index: 3, kind: input, shape index: {}]
  %s4 = inlined_call_operand.vmem [shape: f32[1,128], index: 4, kind: input, shape index: {}]
  %s5 = inlined_call_operand.hbm [shape: f32[256,128], index: 5, kind: output, shape index: {}]
  %s6 = sld [smem:[#allocation0]]
  $region42: #{tpu_custom_call.1} parent=0
    _
  %s8 = ssub.s32 1, %s6
  %s9 = scalar_select 0, %s8, %s6
  $region1: #{tpu_custom_call.1} parent=0
    #allocation2 [shape = 'u8[65536]{0}', space=vmem, size = 0x10000, scoped, tag = 'input window, operand 0, single buffered']
    #allocation3 [shape = 's32[1]{0}', space=sflag, size = 0x4, scoped, tag = 'scoped memory for tpu_custom_call.1']
    #allocation4 [shape = 's32[1]{0}', space=sflag, size = 0x4, scoped, tag = 'scoped memory for tpu_custom_call.1']
    #allocation5 [shape = 'u8[32768]{0}', space=vmem, size = 0x8000, scoped, tag = 'input window, operand 1, single buffered']
    #allocation6 [shape = 's32[1]{0}', space=sflag, size = 0x4, scoped, tag = 'scoped memory for tpu_custom_call.1']
    #allocation7 [shape = 'u8[32768]{0}', space=vmem, size = 0x8000, scoped, tag = 'input window, operand 3, single buffered']
    #allocation8 [shape = 'u8[131072]{0}', space=vmem, size = 0x20000, scoped, tag = 'output window, operand 0, single buffered']
    %10 = vsyncpa [#allocation3], 0
    %11 = vsyncpa [#allocation6], 0
    %12 = vsyncpa [#allocation4], 0
    // Predicated region
    $region2: #{tpu_custom_call.1} parent=1 // pred_check
      _
    $region3: #{tpu_custom_call.1} parent=1 // pred_check_branch
      %14 = sbr.rel (0) target = $region5
    $region4: #{tpu_custom_call.1} parent=1 // pred_region
      %s16 = ssub.s32 2048, 2048
      %17 = vsyncadd [#allocation3], %s16
      %s18 = sshll.u32 [#allocation2], 4
      %s19 = int_to_ptr.vmem [resolvable:$true] %s18
      %24 = dma.hbm_to_vmem [thread:$0]  %s0, 2048, %s19, [#allocation3], 64, 64, 4
    $region5: #{tpu_custom_call.1} parent=1 // pred_fallthru
      _
    // Predicated region
    $region6: #{tpu_custom_call.1} parent=1 // pred_check
      _
    $region7: #{tpu_custom_call.1} parent=1 // pred_check_branch
      %26 = sbr.rel (0) target = $region9
    $region8: #{tpu_custom_call.1} parent=1 // pred_region
      %s28 = ssub.s32 1024, 1024
      %29 = vsyncadd [#allocation6], %s28
      %s30 = sshll.u32 [#allocation5], 4
      %s31 = int_to_ptr.vmem [resolvable:$true] %s30
      %36 = dma.hbm_to_vmem [thread:$0]  %s1, 1024, %s31, [#allocation6], 64, 64, 4
    $region9: #{tpu_custom_call.1} parent=1 // pred_fallthru
      _
    // Predicated region
    $region10: #{tpu_custom_call.1} parent=1 // pred_check
      _
    $region11: #{tpu_custom_call.1} parent=1 // pred_check_branch
      %38 = sbr.rel (0) target = $region13
    $region12: #{tpu_custom_call.1} parent=1 // pred_region
      _
    $region13: #{tpu_custom_call.1} parent=1 // pred_fallthru
      _
    // Predicated region
    $region14: #{tpu_custom_call.1} parent=1 // pred_check
      _
    $region15: #{tpu_custom_call.1} parent=1 // pred_check_branch
      %40 = sbr.rel (0) target = $region17
    $region16: #{tpu_custom_call.1} parent=1 // pred_region
      %s42 = ssub.s32 1024, 1024
      %43 = vsyncadd [#allocation6], %s42
      %s44 = sshll.u32 [#allocation7], 4
      %s45 = int_to_ptr.vmem [resolvable:$true] %s44
      %50 = dma.hbm_to_vmem [thread:$0]  %s3, 1024, %s45, [#allocation6], 64, 64, 4
    $region17: #{tpu_custom_call.1} parent=1 // pred_fallthru
      _
    // Predicated region
    $region18: #{tpu_custom_call.1} parent=1 // pred_check
      _
    $region19: #{tpu_custom_call.1} parent=1 // pred_check_branch
      %52 = sbr.rel (0) target = $region21
    $region20: #{tpu_custom_call.1} parent=1 // pred_region
      _
    $region21: #{tpu_custom_call.1} parent=1 // pred_fallthru
      _
    // Predicated region
    $region22: #{tpu_custom_call.1} parent=1 // pred_check
      _
    $region23: #{tpu_custom_call.1} parent=1 // pred_check_branch
      %54 = sbr.rel (0) target = $region25
    $region24: #{tpu_custom_call.1} parent=1 // pred_region
      %55 = dma.done [#allocation3], 2048
    $region25: #{tpu_custom_call.1} parent=1 // pred_fallthru
      _
    // Predicated region
    $region26: #{tpu_custom_call.1} parent=1 // pred_check
      _
    $region27: #{tpu_custom_call.1} parent=1 // pred_check_branch
      %57 = sbr.rel (0) target = $region29
    $region28: #{tpu_custom_call.1} parent=1 // pred_region
      %58 = dma.done [#allocation6], 1024
    $region29: #{tpu_custom_call.1} parent=1 // pred_fallthru
      _
    // Predicated region
    $region30: #{tpu_custom_call.1} parent=1 // pred_check
      _
    $region31: #{tpu_custom_call.1} parent=1 // pred_check_branch
      %60 = sbr.rel (0) target = $region33
    $region32: #{tpu_custom_call.1} parent=1 // pred_region
      %61 = dma.done [#allocation6], 1024
    $region33: #{tpu_custom_call.1} parent=1 // pred_fallthru
      _
    %v63 = vld [vmem:[#allocation2] sm:$0xf]
    %v64 = vld [vmem:[#allocation2 + $0x4] sm:$0xf]
    %v65 = vld [vmem:[#allocation2 + $0x8] sm:$0xf]
    %v66 = vld [vmem:[#allocation2 + $0xc] sm:$0xf]
    %v67 = vld [vmem:[#allocation2 + $0x10] sm:$0xf]
    %v68 = vld [vmem:[#allocation2 + $0x14] sm:$0xf]
    %v69 = vld [vmem:[#allocation2 + $0x18] sm:$0xf]
    %v70 = vld [vmem:[#allocation2 + $0x1c] sm:$0xf]
    %v71 = vld [vmem:[#allocation2 + $0x20] sm:$0xf]
    %v72 = vld [vmem:[#allocation2 + $0x24] sm:$0xf]
    %v73 = vld [vmem:[#allocation2 + $0x28] sm:$0xf]
    %v74 = vld [vmem:[#allocation2 + $0x2c] sm:$0xf]
    %v75 = vld [vmem:[#allocation2 + $0x30] sm:$0xf]
    %v76 = vld [vmem:[#allocation2 + $0x34] sm:$0xf]
    %v77 = vld [vmem:[#allocation2 + $0x38] sm:$0xf]
    %v78 = vld [vmem:[#allocation2 + $0x3c] sm:$0xf]
    %v79 = vld [vmem:[#allocation2 + $0x40] sm:$0xf]
    %v80 = vld [vmem:[#allocation2 + $0x44] sm:$0xf]
    %v81 = vld [vmem:[#allocation2 + $0x48] sm:$0xf]
    %v82 = vld [vmem:[#allocation2 + $0x4c] sm:$0xf]
    %v83 = vld [vmem:[#allocation2 + $0x50] sm:$0xf]
    %v84 = vld [vmem:[#allocation2 + $0x54] sm:$0xf]
    %v85 = vld [vmem:[#allocation2 + $0x58] sm:$0xf]
    %v86 = vld [vmem:[#allocation2 + $0x5c] sm:$0xf]
    %v87 = vld [vmem:[#allocation2 + $0x60] sm:$0xf]
    %v88 = vld [vmem:[#allocation2 + $0x64] sm:$0xf]
    %v89 = vld [vmem:[#allocation2 + $0x68] sm:$0xf]
    %v90 = vld [vmem:[#allocation2 + $0x6c] sm:$0xf]
    %v91 = vld [vmem:[#allocation2 + $0x70] sm:$0xf]
    %v92 = vld [vmem:[#allocation2 + $0x74] sm:$0xf]
    %v93 = vld [vmem:[#allocation2 + $0x78] sm:$0xf]
    %v94 = vld [vmem:[#allocation2 + $0x7c] sm:$0xf]
    %v95 = vld [vmem:[#allocation5] sm:$0xf]
    %v96 = vld [vmem:[#allocation5 + $0x4] sm:$0xf]
    %v97 = vld [vmem:[#allocation5 + $0x8] sm:$0xf]
    %v98 = vld [vmem:[#allocation5 + $0xc] sm:$0xf]
    %v99 = vld [vmem:[#allocation5 + $0x10] sm:$0xf]
    %v100 = vld [vmem:[#allocation5 + $0x14] sm:$0xf]
    %v101 = vld [vmem:[#allocation5 + $0x18] sm:$0xf]
    %v102 = vld [vmem:[#allocation5 + $0x1c] sm:$0xf]
    %v103 = vld [vmem:[#allocation5 + $0x20] sm:$0xf]
    %v104 = vld [vmem:[#allocation5 + $0x24] sm:$0xf]
    %v105 = vld [vmem:[#allocation5 + $0x28] sm:$0xf]
    %v106 = vld [vmem:[#allocation5 + $0x2c] sm:$0xf]
    %v107 = vld [vmem:[#allocation5 + $0x30] sm:$0xf]
    %v108 = vld [vmem:[#allocation5 + $0x34] sm:$0xf]
    %v109 = vld [vmem:[#allocation5 + $0x38] sm:$0xf]
    %v110 = vld [vmem:[#allocation5 + $0x3c] sm:$0xf]
    %v111 = vld [vmem:[%s2] sm:$0x1]
    %v113 = vlaneseq
    %v114 = vshrl.u32 %v113, 7
    %v115 = vsub.s32 0, %v114
    %v116 = vrot.slane %v111, %v115
    %v150 = vunpack.c.l.b16 %v63
    %v151 = vunpack.c.l.b16 %v64
    %v152 = vunpack.c.l.b16 %v65
    %v153 = vunpack.c.l.b16 %v66
    %v154 = vunpack.c.l.b16 %v67
    %v155 = vunpack.c.l.b16 %v68
    %v156 = vunpack.c.l.b16 %v69
    %v157 = vunpack.c.l.b16 %v70
    %v158 = vunpack.c.l.b16 %v71
    %v159 = vunpack.c.l.b16 %v72
    %v160 = vunpack.c.l.b16 %v73
    %v161 = vunpack.c.l.b16 %v74
    %v162 = vunpack.c.l.b16 %v75
    %v163 = vunpack.c.l.b16 %v76
    %v164 = vunpack.c.l.b16 %v77
    %v165 = vunpack.c.l.b16 %v78
    %v166 = vunpack.c.l.b16 %v79
    %v167 = vunpack.c.l.b16 %v80
    %v168 = vunpack.c.l.b16 %v81
    %v169 = vunpack.c.l.b16 %v82
    %v170 = vunpack.c.l.b16 %v83
    %v171 = vunpack.c.l.b16 %v84
    %v172 = vunpack.c.l.b16 %v85
    %v173 = vunpack.c.l.b16 %v86
    %v174 = vunpack.c.l.b16 %v87
    %v175 = vunpack.c.l.b16 %v88
    %v176 = vunpack.c.l.b16 %v89
    %v177 = vunpack.c.l.b16 %v90
    %v178 = vunpack.c.l.b16 %v91
    %v179 = vunpack.c.l.b16 %v92
    %v180 = vunpack.c.l.b16 %v93
    %v181 = vunpack.c.l.b16 %v94
    %v182 = vpack.c.b16 %v151, %v150
    %v183 = vpack.c.b16 %v153, %v152
    %v184 = vpack.c.b16 %v155, %v154
    %v185 = vpack.c.b16 %v157, %v156
    %v186 = vpack.c.b16 %v159, %v158
    %v187 = vpack.c.b16 %v161, %v160
    %v188 = vpack.c.b16 %v163, %v162
    %v189 = vpack.c.b16 %v165, %v164
    %v190 = vpack.c.b16 %v167, %v166
    %v191 = vpack.c.b16 %v169, %v168
    %v192 = vpack.c.b16 %v171, %v170
    %v193 = vpack.c.b16 %v173, %v172
    %v194 = vpack.c.b16 %v175, %v174
    %v195 = vpack.c.b16 %v177, %v176
    %v196 = vpack.c.b16 %v179, %v178
    %v197 = vpack.c.b16 %v181, %v180
    %v230 = vunpack.c.l.b16 %v95
    %v231 = vunpack.c.l.b16 %v96
    %v232 = vunpack.c.l.b16 %v97
    %v233 = vunpack.c.l.b16 %v98
    %v234 = vunpack.c.l.b16 %v99
    %v235 = vunpack.c.l.b16 %v100
    %v236 = vunpack.c.l.b16 %v101
    %v237 = vunpack.c.l.b16 %v102
    %v238 = vunpack.c.l.b16 %v103
    %v239 = vunpack.c.l.b16 %v104
    %v240 = vunpack.c.l.b16 %v105
    %v241 = vunpack.c.l.b16 %v106
    %v242 = vunpack.c.l.b16 %v107
    %v243 = vunpack.c.l.b16 %v108
    %v244 = vunpack.c.l.b16 %v109
    %v245 = vunpack.c.l.b16 %v110
    %v246 = vpack.c.b16 %v231, %v230
    %v247 = vpack.c.b16 %v233, %v232
    %v248 = vpack.c.b16 %v235, %v234
    %v249 = vpack.c.b16 %v237, %v236
    %v250 = vpack.c.b16 %v239, %v238
    %v251 = vpack.c.b16 %v241, %v240
    %v252 = vpack.c.b16 %v243, %v242
    %v253 = vpack.c.b16 %v245, %v244
    %262 = vmatprep.subr.bf16.mxu0 0
    %263 = vmatpush1.bf16.msra.mxu0 %v246
    %264 = vmatprep.subr.bf16.mxu0 0
    %265 = vmatpush1.bf16.msra.mxu0 %v247
    %266 = vmatprep.subr.bf16.mxu0 0
    %267 = vmatpush1.bf16.msra.mxu0 %v248
    %268 = vmatprep.subr.bf16.mxu0 0
    %269 = vmatpush1.bf16.msra.mxu0 %v249
    %270 = vmatprep.subr.bf16.mxu0 0
    %271 = vmatpush1.bf16.msra.mxu0 %v250
    %272 = vmatprep.subr.bf16.mxu0 0
    %273 = vmatpush1.bf16.msra.mxu0 %v251
    %274 = vmatprep.subr.bf16.mxu0 0
    %275 = vmatpush1.bf16.msra.mxu0 %v252
    %276 = vmatprep.subr.bf16.mxu0 0
    %277 = vmatpush1.bf16.msra.mxu0 %v253
    %278 = vmatprep.subr.bf16.mxu0 0
    %279 = vmatpush1.bf16.msra.mxu0 0
    %280 = vmatprep.subr.bf16.mxu0 0
    %281 = vmatpush1.bf16.msra.mxu0 0
    %282 = vmatprep.subr.bf16.mxu0 0
    %283 = vmatpush1.bf16.msra.mxu0 0
    %284 = vmatprep.subr.bf16.mxu0 0
    %285 = vmatpush1.bf16.msra.mxu0 0
    %286 = vmatprep.subr.bf16.mxu0 0
    %287 = vmatpush1.bf16.msra.mxu0 0
    %288 = vmatprep.subr.bf16.mxu0 0
    %289 = vmatpush1.bf16.msra.mxu0 0
    %290 = vmatprep.subr.bf16.mxu0 0
    %291 = vmatpush1.bf16.msra.mxu0 0
    %292 = vmatprep.subr.bf16.mxu0 0
    %293 = vmatpush1.bf16.msra.mxu0 0
    %294 = vmatprep.mubr.bf16.mxu0 0
    %295 = vmatmul.mubr.bf16.gmra.mrb[0].mxu0 %v182
    %v296 = vpop.f32.mrb[0].mxu0
    %v297 = vadd.f32 %v116, %v296
    %v298 = vpop.f32.mrb[0].mxu0
    %v299 = vpop.f32.mrb[0].mxu0
    %v300 = vadd.f32 %v116, %v299
    %v301 = vpop.f32.mrb[0].mxu0
    %302 = vmatprep.mubr.bf16.mxu0 0
    %303 = vmatmul.mubr.bf16.gmra.mrb[0].mxu0 %v183
    %v304 = vpop.f32.mrb[0].mxu0
    %v305 = vadd.f32 %v116, %v304
    %v306 = vpop.f32.mrb[0].mxu0
    %v307 = vpop.f32.mrb[0].mxu0
    %v308 = vadd.f32 %v116, %v307
    %v309 = vpop.f32.mrb[0].mxu0
    %310 = vmatprep.mubr.bf16.mxu0 0
    %311 = vmatmul.mubr.bf16.gmra.mrb[0].mxu0 %v184
    %v312 = vpop.f32.mrb[0].mxu0
    %v313 = vadd.f32 %v116, %v312
    %v314 = vpop.f32.mrb[0].mxu0
    %v315 = vpop.f32.mrb[0].mxu0
    %v316 = vadd.f32 %v116, %v315
    %v317 = vpop.f32.mrb[0].mxu0
    %318 = vmatprep.mubr.bf16.mxu0 0
    %319 = vmatmul.mubr.bf16.gmra.mrb[0].mxu0 %v185
    %v320 = vpop.f32.mrb[0].mxu0
    %v321 = vadd.f32 %v116, %v320
    %v322 = vpop.f32.mrb[0].mxu0
    %v323 = vpop.f32.mrb[0].mxu0
    %v324 = vadd.f32 %v116, %v323
    %v325 = vpop.f32.mrb[0].mxu0
    %326 = vmatprep.mubr.bf16.mxu0 0
    %327 = vmatmul.mubr.bf16.gmra.mrb[0].mxu0 %v186
    %v328 = vpop.f32.mrb[0].mxu0
    %v329 = vadd.f32 %v116, %v328
    %v330 = vpop.f32.mrb[0].mxu0
    %v331 = vpop.f32.mrb[0].mxu0
    %v332 = vadd.f32 %v116, %v331
    %v333 = vpop.f32.mrb[0].mxu0
    %334 = vmatprep.mubr.bf16.mxu0 0
    %335 = vmatmul.mubr.bf16.gmra.mrb[0].mxu0 %v187
    %v336 = vpop.f32.mrb[0].mxu0
    %v337 = vadd.f32 %v116, %v336
    %v338 = vpop.f32.mrb[0].mxu0
    %v339 = vpop.f32.mrb[0].mxu0
    %v340 = vadd.f32 %v116, %v339
    %v341 = vpop.f32.mrb[0].mxu0
    %342 = vmatprep.mubr.bf16.mxu0 0
    %343 = vmatmul.mubr.bf16.gmra.mrb[0].mxu0 %v188
    %v344 = vpop.f32.mrb[0].mxu0
    %v345 = vadd.f32 %v116, %v344
    %v346 = vpop.f32.mrb[0].mxu0
    %v347 = vpop.f32.mrb[0].mxu0
    %v348 = vadd.f32 %v116, %v347
    %v349 = vpop.f32.mrb[0].mxu0
    %350 = vmatprep.mubr.bf16.mxu0 0
    %351 = vmatmul.mubr.bf16.gmra.mrb[0].mxu0 %v189
    %v352 = vpop.f32.mrb[0].mxu0
    %v353 = vadd.f32 %v116, %v352
    %v354 = vpop.f32.mrb[0].mxu0
    %v355 = vpop.f32.mrb[0].mxu0
    %v356 = vadd.f32 %v116, %v355
    %v357 = vpop.f32.mrb[0].mxu0
    %358 = vmatprep.mubr.bf16.mxu0 0
    %359 = vmatmul.mubr.bf16.gmra.mrb[0].mxu0 %v190
    %v360 = vpop.f32.mrb[0].mxu0
    %v361 = vadd.f32 %v116, %v360
    %v362 = vpop.f32.mrb[0].mxu0
    %v363 = vpop.f32.mrb[0].mxu0
    %v364 = vadd.f32 %v116, %v363
    %v365 = vpop.f32.mrb[0].mxu0
    %366 = vmatprep.mubr.bf16.mxu0 0
    %367 = vmatmul.mubr.bf16.gmra.mrb[0].mxu0 %v191
    %v368 = vpop.f32.mrb[0].mxu0
    %v369 = vadd.f32 %v116, %v368
    %v370 = vpop.f32.mrb[0].mxu0
    %v371 = vpop.f32.mrb[0].mxu0
    %v372 = vadd.f32 %v116, %v371
    %v373 = vpop.f32.mrb[0].mxu0
    %374 = vmatprep.mubr.bf16.mxu0 0
    %375 = vmatmul.mubr.bf16.gmra.mrb[0].mxu0 %v192
    %v376 = vpop.f32.mrb[0].mxu0
    %v377 = vadd.f32 %v116, %v376
    %v378 = vpop.f32.mrb[0].mxu0
    %v379 = vpop.f32.mrb[0].mxu0
    %v380 = vadd.f32 %v116, %v379
    %v381 = vpop.f32.mrb[0].mxu0
    %382 = vmatprep.mubr.bf16.mxu0 0
    %383 = vmatmul.mubr.bf16.gmra.mrb[0].mxu0 %v193
    %v384 = vpop.f32.mrb[0].mxu0
    %v385 = vadd.f32 %v116, %v384
    %v386 = vpop.f32.mrb[0].mxu0
    %v387 = vpop.f32.mrb[0].mxu0
    %v388 = vadd.f32 %v116, %v387
    %v389 = vpop.f32.mrb[0].mxu0
    %390 = vmatprep.mubr.bf16.mxu0 0
    %391 = vmatmul.mubr.bf16.gmra.mrb[0].mxu0 %v194
    %v392 = vpop.f32.mrb[0].mxu0
    %v393 = vadd.f32 %v116, %v392
    %v394 = vpop.f32.mrb[0].mxu0
    %v395 = vpop.f32.mrb[0].mxu0
    %v396 = vadd.f32 %v116, %v395
    %v397 = vpop.f32.mrb[0].mxu0
    %398 = vmatprep.mubr.bf16.mxu0 0
    %399 = vmatmul.mubr.bf16.gmra.mrb[0].mxu0 %v195
    %v400 = vpop.f32.mrb[0].mxu0
    %v401 = vadd.f32 %v116, %v400
    %v402 = vpop.f32.mrb[0].mxu0
    %v403 = vpop.f32.mrb[0].mxu0
    %v404 = vadd.f32 %v116, %v403
    %v405 = vpop.f32.mrb[0].mxu0
    %406 = vmatprep.mubr.bf16.mxu0 0
    %407 = vmatmul.mubr.bf16.gmra.mrb[0].mxu0 %v196
    %v408 = vpop.f32.mrb[0].mxu0
    %v409 = vadd.f32 %v116, %v408
    %v410 = vpop.f32.mrb[0].mxu0
    %v411 = vpop.f32.mrb[0].mxu0
    %v412 = vadd.f32 %v116, %v411
    %v413 = vpop.f32.mrb[0].mxu0
    %414 = vmatprep.mubr.bf16.mxu0 0
    %415 = vmatmul.mubr.bf16.gmra.mrb[0].mxu0 %v197
    %v416 = vpop.f32.mrb[0].mxu0
    %v417 = vadd.f32 %v116, %v416
    %v418 = vpop.f32.mrb[0].mxu0
    %v419 = vpop.f32.mrb[0].mxu0
    %v420 = vadd.f32 %v116, %v419
    %v421 = vpop.f32.mrb[0].mxu0
    %422 = vdwg.mxu0
    %v423 = vmul.f32 %v297, 0.5
    %v424 = vmul.f32 %v300, 0.5
    %v425 = vmul.f32 %v305, 0.5
    %v426 = vmul.f32 %v308, 0.5
    %v427 = vmul.f32 %v313, 0.5
    %v428 = vmul.f32 %v316, 0.5
    %v429 = vmul.f32 %v321, 0.5
    %v430 = vmul.f32 %v324, 0.5
    %v431 = vmul.f32 %v329, 0.5
    %v432 = vmul.f32 %v332, 0.5
    %v433 = vmul.f32 %v337, 0.5
    %v434 = vmul.f32 %v340, 0.5
    %v435 = vmul.f32 %v345, 0.5
    %v436 = vmul.f32 %v348, 0.5
    %v437 = vmul.f32 %v353, 0.5
    %v438 = vmul.f32 %v356, 0.5
    %v439 = vmul.f32 %v361, 0.5
    %v440 = vmul.f32 %v364, 0.5
    %v441 = vmul.f32 %v369, 0.5
    %v442 = vmul.f32 %v372, 0.5
    %v443 = vmul.f32 %v377, 0.5
    %v444 = vmul.f32 %v380, 0.5
    %v445 = vmul.f32 %v385, 0.5
    %v446 = vmul.f32 %v388, 0.5
    %v447 = vmul.f32 %v393, 0.5
    %v448 = vmul.f32 %v396, 0.5
    %v449 = vmul.f32 %v401, 0.5
    %v450 = vmul.f32 %v404, 0.5
    %v451 = vmul.f32 %v409, 0.5
    %v452 = vmul.f32 %v412, 0.5
    %v453 = vmul.f32 %v417, 0.5
    %v454 = vmul.f32 %v420, 0.5
    %v455 = vmul.f32 %v297, 0.044715
    %v456 = vmul.f32 %v300, 0.044715
    %v457 = vmul.f32 %v305, 0.044715
    %v458 = vmul.f32 %v308, 0.044715
    %v459 = vmul.f32 %v313, 0.044715
    %v460 = vmul.f32 %v316, 0.044715
    %v461 = vmul.f32 %v321, 0.044715
    %v462 = vmul.f32 %v324, 0.044715
    %v463 = vmul.f32 %v329, 0.044715
    %v464 = vmul.f32 %v332, 0.044715
    %v465 = vmul.f32 %v337, 0.044715
    %v466 = vmul.f32 %v340, 0.044715
    %v467 = vmul.f32 %v345, 0.044715
    %v468 = vmul.f32 %v348, 0.044715
    %v469 = vmul.f32 %v353, 0.044715
    %v470 = vmul.f32 %v356, 0.044715
    %v471 = vmul.f32 %v361, 0.044715
    %v472 = vmul.f32 %v364, 0.044715
    %v473 = vmul.f32 %v369, 0.044715
    %v474 = vmul.f32 %v372, 0.044715
    %v475 = vmul.f32 %v377, 0.044715
    %v476 = vmul.f32 %v380, 0.044715
    %v477 = vmul.f32 %v385, 0.044715
    %v478 = vmul.f32 %v388, 0.044715
    %v479 = vmul.f32 %v393, 0.044715
    %v480 = vmul.f32 %v396, 0.044715
    %v481 = vmul.f32 %v401, 0.044715
    %v482 = vmul.f32 %v404, 0.044715
    %v483 = vmul.f32 %v409, 0.044715
    %v484 = vmul.f32 %v412, 0.044715
    %v485 = vmul.f32 %v417, 0.044715
    %v486 = vmul.f32 %v420, 0.044715
    %v487 = vmul.f32 %v455, %v297
    %v488 = vmul.f32 %v456, %v300
    %v489 = vmul.f32 %v457, %v305
    %v490 = vmul.f32 %v458, %v308
    %v491 = vmul.f32 %v459, %v313
    %v492 = vmul.f32 %v460, %v316
    %v493 = vmul.f32 %v461, %v321
    %v494 = vmul.f32 %v462, %v324
    %v495 = vmul.f32 %v463, %v329
    %v496 = vmul.f32 %v464, %v332
    %v497 = vmul.f32 %v465, %v337
    %v498 = vmul.f32 %v466, %v340
    %v499 = vmul.f32 %v467, %v345
    %v500 = vmul.f32 %v468, %v348
    %v501 = vmul.f32 %v469, %v353
    %v502 = vmul.f32 %v470, %v356
    %v503 = vmul.f32 %v471, %v361
    %v504 = vmul.f32 %v472, %v364
    %v505 = vmul.f32 %v473, %v369
    %v506 = vmul.f32 %v474, %v372
    %v507 = vmul.f32 %v475, %v377
    %v508 = vmul.f32 %v476, %v380
    %v509 = vmul.f32 %v477, %v385
    %v510 = vmul.f32 %v478, %v388
    %v511 = vmul.f32 %v479, %v393
    %v512 = vmul.f32 %v480, %v396
    %v513 = vmul.f32 %v481, %v401
    %v514 = vmul.f32 %v482, %v404
    %v515 = vmul.f32 %v483, %v409
    %v516 = vmul.f32 %v484, %v412
    %v517 = vmul.f32 %v485, %v417
    %v518 = vmul.f32 %v486, %v420
    %v519 = vmul.f32 %v487, %v297
    %v520 = vmul.f32 %v488, %v300
    %v521 = vmul.f32 %v489, %v305
    %v522 = vmul.f32 %v490, %v308
    %v523 = vmul.f32 %v491, %v313
    %v524 = vmul.f32 %v492, %v316
    %v525 = vmul.f32 %v493, %v321
    %v526 = vmul.f32 %v494, %v324
    %v527 = vmul.f32 %v495, %v329
    %v528 = vmul.f32 %v496, %v332
    %v529 = vmul.f32 %v497, %v337
    %v530 = vmul.f32 %v498, %v340
    %v531 = vmul.f32 %v499, %v345
    %v532 = vmul.f32 %v500, %v348
    %v533 = vmul.f32 %v501, %v353
    %v534 = vmul.f32 %v502, %v356
    %v535 = vmul.f32 %v503, %v361
    %v536 = vmul.f32 %v504, %v364
    %v537 = vmul.f32 %v505, %v369
    %v538 = vmul.f32 %v506, %v372
    %v539 = vmul.f32 %v507, %v377
    %v540 = vmul.f32 %v508, %v380
    %v541 = vmul.f32 %v509, %v385
    %v542 = vmul.f32 %v510, %v388
    %v543 = vmul.f32 %v511, %v393
    %v544 = vmul.f32 %v512, %v396
    %v545 = vmul.f32 %v513, %v401
    %v546 = vmul.f32 %v514, %v404
    %v547 = vmul.f32 %v515, %v409
    %v548 = vmul.f32 %v516, %v412
    %v549 = vmul.f32 %v517, %v417
    %v550 = vmul.f32 %v518, %v420
    %v551 = vadd.f32 %v297, %v519
    %v552 = vadd.f32 %v300, %v520
    %v553 = vadd.f32 %v305, %v521
    %v554 = vadd.f32 %v308, %v522
    %v555 = vadd.f32 %v313, %v523
    %v556 = vadd.f32 %v316, %v524
    %v557 = vadd.f32 %v321, %v525
    %v558 = vadd.f32 %v324, %v526
    %v559 = vadd.f32 %v329, %v527
    %v560 = vadd.f32 %v332, %v528
    %v561 = vadd.f32 %v337, %v529
    %v562 = vadd.f32 %v340, %v530
    %v563 = vadd.f32 %v345, %v531
    %v564 = vadd.f32 %v348, %v532
    %v565 = vadd.f32 %v353, %v533
    %v566 = vadd.f32 %v356, %v534
    %v567 = vadd.f32 %v361, %v535
    %v568 = vadd.f32 %v364, %v536
    %v569 = vadd.f32 %v369, %v537
    %v570 = vadd.f32 %v372, %v538
    %v571 = vadd.f32 %v377, %v539
    %v572 = vadd.f32 %v380, %v540
    %v573 = vadd.f32 %v385, %v541
    %v574 = vadd.f32 %v388, %v542
    %v575 = vadd.f32 %v393, %v543
    %v576 = vadd.f32 %v396, %v544
    %v577 = vadd.f32 %v401, %v545
    %v578 = vadd.f32 %v404, %v546
    %v579 = vadd.f32 %v409, %v547
    %v580 = vadd.f32 %v412, %v548
    %v581 = vadd.f32 %v417, %v549
    %v582 = vadd.f32 %v420, %v550
    %v583 = vmul.f32 %v551, 0.7978846
    %v584 = vmul.f32 %v552, 0.7978846
    %v585 = vmul.f32 %v553, 0.7978846
    %v586 = vmul.f32 %v554, 0.7978846
    %v587 = vmul.f32 %v555, 0.7978846
    %v588 = vmul.f32 %v556, 0.7978846
    %v589 = vmul.f32 %v557, 0.7978846
    %v590 = vmul.f32 %v558, 0.7978846
    %v591 = vmul.f32 %v559, 0.7978846
    %v592 = vmul.f32 %v560, 0.7978846
    %v593 = vmul.f32 %v561, 0.7978846
    %v594 = vmul.f32 %v562, 0.7978846
    %v595 = vmul.f32 %v563, 0.7978846
    %v596 = vmul.f32 %v564, 0.7978846
    %v597 = vmul.f32 %v565, 0.7978846
    %v598 = vmul.f32 %v566, 0.7978846
    %v599 = vmul.f32 %v567, 0.7978846
    %v600 = vmul.f32 %v568, 0.7978846
    %v601 = vmul.f32 %v569, 0.7978846
    %v602 = vmul.f32 %v570, 0.7978846
    %v603 = vmul.f32 %v571, 0.7978846
    %v604 = vmul.f32 %v572, 0.7978846
    %v605 = vmul.f32 %v573, 0.7978846
    %v606 = vmul.f32 %v574, 0.7978846
    %v607 = vmul.f32 %v575, 0.7978846
    %v608 = vmul.f32 %v576, 0.7978846
    %v609 = vmul.f32 %v577, 0.7978846
    %v610 = vmul.f32 %v578, 0.7978846
    %v611 = vmul.f32 %v579, 0.7978846
    %v612 = vmul.f32 %v580, 0.7978846
    %v613 = vmul.f32 %v581, 0.7978846
    %v614 = vmul.f32 %v582, 0.7978846
    %v615 = vtanh.pop %v583
    %v616 = vtanh.pop %v584
    %v617 = vtanh.pop %v585
    %v618 = vtanh.pop %v586
    %v619 = vtanh.pop %v587
    %v620 = vtanh.pop %v588
    %v621 = vtanh.pop %v589
    %v622 = vtanh.pop %v590
    %v623 = vtanh.pop %v591
    %v624 = vtanh.pop %v592
    %v625 = vtanh.pop %v593
    %v626 = vtanh.pop %v594
    %v627 = vtanh.pop %v595
    %v628 = vtanh.pop %v596
    %v629 = vtanh.pop %v597
    %v630 = vtanh.pop %v598
    %v631 = vtanh.pop %v599
    %v632 = vtanh.pop %v600
    %v633 = vtanh.pop %v601
    %v634 = vtanh.pop %v602
    %v635 = vtanh.pop %v603
    %v636 = vtanh.pop %v604
    %v637 = vtanh.pop %v605
    %v638 = vtanh.pop %v606
    %v639 = vtanh.pop %v607
    %v640 = vtanh.pop %v608
    %v641 = vtanh.pop %v609
    %v642 = vtanh.pop %v610
    %v643 = vtanh.pop %v611
    %v644 = vtanh.pop %v612
    %v645 = vtanh.pop %v613
    %v646 = vtanh.pop %v614
    %v647 = vadd.f32 %v615, 1.0
    %v648 = vadd.f32 %v616, 1.0
    %v649 = vadd.f32 %v617, 1.0
    %v650 = vadd.f32 %v618, 1.0
    %v651 = vadd.f32 %v619, 1.0
    %v652 = vadd.f32 %v620, 1.0
    %v653 = vadd.f32 %v621, 1.0
    %v654 = vadd.f32 %v622, 1.0
    %v655 = vadd.f32 %v623, 1.0
    %v656 = vadd.f32 %v624, 1.0
    %v657 = vadd.f32 %v625, 1.0
    %v658 = vadd.f32 %v626, 1.0
    %v659 = vadd.f32 %v627, 1.0
    %v660 = vadd.f32 %v628, 1.0
    %v661 = vadd.f32 %v629, 1.0
    %v662 = vadd.f32 %v630, 1.0
    %v663 = vadd.f32 %v631, 1.0
    %v664 = vadd.f32 %v632, 1.0
    %v665 = vadd.f32 %v633, 1.0
    %v666 = vadd.f32 %v634, 1.0
    %v667 = vadd.f32 %v635, 1.0
    %v668 = vadd.f32 %v636, 1.0
    %v669 = vadd.f32 %v637, 1.0
    %v670 = vadd.f32 %v638, 1.0
    %v671 = vadd.f32 %v639, 1.0
    %v672 = vadd.f32 %v640, 1.0
    %v673 = vadd.f32 %v641, 1.0
    %v674 = vadd.f32 %v642, 1.0
    %v675 = vadd.f32 %v643, 1.0
    %v676 = vadd.f32 %v644, 1.0
    %v677 = vadd.f32 %v645, 1.0
    %v678 = vadd.f32 %v646, 1.0
    %v679 = vmul.f32 %v423, %v647
    %v680 = vmul.f32 %v424, %v648
    %v681 = vmul.f32 %v425, %v649
    %v682 = vmul.f32 %v426, %v650
    %v683 = vmul.f32 %v427, %v651
    %v684 = vmul.f32 %v428, %v652
    %v685 = vmul.f32 %v429, %v653
    %v686 = vmul.f32 %v430, %v654
    %v687 = vmul.f32 %v431, %v655
    %v688 = vmul.f32 %v432, %v656
    %v689 = vmul.f32 %v433, %v657
    %v690 = vmul.f32 %v434, %v658
    %v691 = vmul.f32 %v435, %v659
    %v692 = vmul.f32 %v436, %v660
    %v693 = vmul.f32 %v437, %v661
    %v694 = vmul.f32 %v438, %v662
    %v695 = vmul.f32 %v439, %v663
    %v696 = vmul.f32 %v440, %v664
    %v697 = vmul.f32 %v441, %v665
    %v698 = vmul.f32 %v442, %v666
    %v699 = vmul.f32 %v443, %v667
    %v700 = vmul.f32 %v444, %v668
    %v701 = vmul.f32 %v445, %v669
    %v702 = vmul.f32 %v446, %v670
    %v703 = vmul.f32 %v447, %v671
    %v704 = vmul.f32 %v448, %v672
    %v705 = vmul.f32 %v449, %v673
    %v706 = vmul.f32 %v450, %v674
    %v707 = vmul.f32 %v451, %v675
    %v708 = vmul.f32 %v452, %v676
    %v709 = vmul.f32 %v453, %v677
    %v710 = vmul.f32 %v454, %v678
    %v711 = vpack.c.bf16 %v680, %v679
    %v712 = vpack.c.bf16 %v682, %v681
    %v713 = vpack.c.bf16 %v684, %v683
    %v714 = vpack.c.bf16 %v686, %v685
    %v715 = vpack.c.bf16 %v688, %v687
    %v716 = vpack.c.bf16 %v690, %v689
    %v717 = vpack.c.bf16 %v692, %v691
    %v718 = vpack.c.bf16 %v694, %v693
    %v719 = vpack.c.bf16 %v696, %v695
    %v720 = vpack.c.bf16 %v698, %v697
    %v721 = vpack.c.bf16 %v700, %v699
    %v722 = vpack.c.bf16 %v702, %v701
    %v723 = vpack.c.bf16 %v704, %v703
    %v724 = vpack.c.bf16 %v706, %v705
    %v725 = vpack.c.bf16 %v708, %v707
    %v726 = vpack.c.bf16 %v710, %v709
    %v727 = vld [vmem:[#allocation7] sm:$0xf]
    %v728 = vld [vmem:[#allocation7 + $0x4] sm:$0xf]
    %v729 = vld [vmem:[#allocation7 + $0x8] sm:$0xf]
    %v730 = vld [vmem:[#allocation7 + $0xc] sm:$0xf]
    %v731 = vld [vmem:[#allocation7 + $0x10] sm:$0xf]
    %v732 = vld [vmem:[#allocation7 + $0x14] sm:$0xf]
    %v733 = vld [vmem:[#allocation7 + $0x18] sm:$0xf]
    %v734 = vld [vmem:[#allocation7 + $0x1c] sm:$0xf]
    %v735 = vld [vmem:[#allocation7 + $0x20] sm:$0xf]
    %v736 = vld [vmem:[#allocation7 + $0x24] sm:$0xf]
    %v737 = vld [vmem:[#allocation7 + $0x28] sm:$0xf]
    %v738 = vld [vmem:[#allocation7 + $0x2c] sm:$0xf]
    %v739 = vld [vmem:[#allocation7 + $0x30] sm:$0xf]
    %v740 = vld [vmem:[#allocation7 + $0x34] sm:$0xf]
    %v741 = vld [vmem:[#allocation7 + $0x38] sm:$0xf]
    %v742 = vld [vmem:[#allocation7 + $0x3c] sm:$0xf]
    %v743 = vld [vmem:[%s4] sm:$0x1]
    %v745 = vlaneseq
    %v746 = vshrl.u32 %v745, 7
    %v747 = vsub.s32 0, %v746
    %v748 = vrot.slane %v743, %v747
    %v766 = vunpack.c.l.b16 %v727
    %v767 = vunpack.c.l.b16 %v728
    %v768 = vunpack.c.l.b16 %v729
    %v769 = vunpack.c.l.b16 %v730
    %v770 = vunpack.c.l.b16 %v731
    %v771 = vunpack.c.l.b16 %v732
    %v772 = vunpack.c.l.b16 %v733
    %v773 = vunpack.c.l.b16 %v734
    %v774 = vunpack.c.l.b16 %v735
    %v775 = vunpack.c.l.b16 %v736
    %v776 = vunpack.c.l.b16 %v737
    %v777 = vunpack.c.l.b16 %v738
    %v778 = vunpack.c.l.b16 %v739
    %v779 = vunpack.c.l.b16 %v740
    %v780 = vunpack.c.l.b16 %v741
    %v781 = vunpack.c.l.b16 %v742
    %v782 = vpack.c.b16 %v767, %v766
    %v783 = vpack.c.b16 %v769, %v768
    %v784 = vpack.c.b16 %v771, %v770
    %v785 = vpack.c.b16 %v773, %v772
    %v786 = vpack.c.b16 %v775, %v774
    %v787 = vpack.c.b16 %v777, %v776
    %v788 = vpack.c.b16 %v779, %v778
    %v789 = vpack.c.b16 %v781, %v780
    %798 = vmatprep.subr.bf16.mxu0 0
    %799 = vmatpush1.bf16.msra.mxu0 %v782
    %800 = vmatprep.subr.bf16.mxu0 0
    %801 = vmatpush1.bf16.msra.mxu0 %v783
    %802 = vmatprep.subr.bf16.mxu0 0
    %803 = vmatpush1.bf16.msra.mxu0 %v784
    %804 = vmatprep.subr.bf16.mxu0 0
    %805 = vmatpush1.bf16.msra.mxu0 %v785
    %806 = vmatprep.subr.bf16.mxu0 0
    %807 = vmatpush1.bf16.msra.mxu0 %v786
    %808 = vmatprep.subr.bf16.mxu0 0
    %809 = vmatpush1.bf16.msra.mxu0 %v787
    %810 = vmatprep.subr.bf16.mxu0 0
    %811 = vmatpush1.bf16.msra.mxu0 %v788
    %812 = vmatprep.subr.bf16.mxu0 0
    %813 = vmatpush1.bf16.msra.mxu0 %v789
    %814 = vmatprep.subr.bf16.mxu0 0
    %815 = vmatpush1.bf16.msra.mxu0 0
    %816 = vmatprep.subr.bf16.mxu0 0
    %817 = vmatpush1.bf16.msra.mxu0 0
    %818 = vmatprep.subr.bf16.mxu0 0
    %819 = vmatpush1.bf16.msra.mxu0 0
    %820 = vmatprep.subr.bf16.mxu0 0
    %821 = vmatpush1.bf16.msra.mxu0 0
    %822 = vmatprep.subr.bf16.mxu0 0
    %823 = vmatpush1.bf16.msra.mxu0 0
    %824 = vmatprep.subr.bf16.mxu0 0
    %825 = vmatpush1.bf16.msra.mxu0 0
    %826 = vmatprep.subr.bf16.mxu0 0
    %827 = vmatpush1.bf16.msra.mxu0 0
    %828 = vmatprep.subr.bf16.mxu0 0
    %829 = vmatpush1.bf16.msra.mxu0 0
    %830 = vmatprep.mubr.bf16.mxu0 0
    %831 = vmatmul.mubr.bf16.gmra.mrb[0].mxu0 %v711
    %v832 = vpop.f32.mrb[0].mxu0
    %v833 = vadd.f32 %v748, %v832
    %v834 = vpop.f32.mrb[0].mxu0
    %v835 = vpop.f32.mrb[0].mxu0
    %v836 = vadd.f32 %v748, %v835
    %v837 = vpop.f32.mrb[0].mxu0
    %838 = vmatprep.mubr.bf16.mxu0 0
    %839 = vmatmul.mubr.bf16.gmra.mrb[0].mxu0 %v712
    %v840 = vpop.f32.mrb[0].mxu0
    %v841 = vadd.f32 %v748, %v840
    %v842 = vpop.f32.mrb[0].mxu0
    %v843 = vpop.f32.mrb[0].mxu0
    %v844 = vadd.f32 %v748, %v843
    %v845 = vpop.f32.mrb[0].mxu0
    %846 = vmatprep.mubr.bf16.mxu0 0
    %847 = vmatmul.mubr.bf16.gmra.mrb[0].mxu0 %v713
    %v848 = vpop.f32.mrb[0].mxu0
    %v849 = vadd.f32 %v748, %v848
    %v850 = vpop.f32.mrb[0].mxu0
    %v851 = vpop.f32.mrb[0].mxu0
    %v852 = vadd.f32 %v748, %v851
    %v853 = vpop.f32.mrb[0].mxu0
    %854 = vmatprep.mubr.bf16.mxu0 0
    %855 = vmatmul.mubr.bf16.gmra.mrb[0].mxu0 %v714
    %v856 = vpop.f32.mrb[0].mxu0
    %v857 = vadd.f32 %v748, %v856
    %v858 = vpop.f32.mrb[0].mxu0
    %v859 = vpop.f32.mrb[0].mxu0
    %v860 = vadd.f32 %v748, %v859
    %v861 = vpop.f32.mrb[0].mxu0
    %862 = vmatprep.mubr.bf16.mxu0 0
    %863 = vmatmul.mubr.bf16.gmra.mrb[0].mxu0 %v715
    %v864 = vpop.f32.mrb[0].mxu0
    %v865 = vadd.f32 %v748, %v864
    %v866 = vpop.f32.mrb[0].mxu0
    %v867 = vpop.f32.mrb[0].mxu0
    %v868 = vadd.f32 %v748, %v867
    %v869 = vpop.f32.mrb[0].mxu0
    %870 = vmatprep.mubr.bf16.mxu0 0
    %871 = vmatmul.mubr.bf16.gmra.mrb[0].mxu0 %v716
    %v872 = vpop.f32.mrb[0].mxu0
    %v873 = vadd.f32 %v748, %v872
    %v874 = vpop.f32.mrb[0].mxu0
    %v875 = vpop.f32.mrb[0].mxu0
    %v876 = vadd.f32 %v748, %v875
    %v877 = vpop.f32.mrb[0].mxu0
    %878 = vmatprep.mubr.bf16.mxu0 0
    %879 = vmatmul.mubr.bf16.gmra.mrb[0].mxu0 %v717
    %v880 = vpop.f32.mrb[0].mxu0
    %v881 = vadd.f32 %v748, %v880
    %v882 = vpop.f32.mrb[0].mxu0
    %v883 = vpop.f32.mrb[0].mxu0
    %v884 = vadd.f32 %v748, %v883
    %v885 = vpop.f32.mrb[0].mxu0
    %886 = vmatprep.mubr.bf16.mxu0 0
    %887 = vmatmul.mubr.bf16.gmra.mrb[0].mxu0 %v718
    %v888 = vpop.f32.mrb[0].mxu0
    %v889 = vadd.f32 %v748, %v888
    %v890 = vpop.f32.mrb[0].mxu0
    %v891 = vpop.f32.mrb[0].mxu0
    %v892 = vadd.f32 %v748, %v891
    %v893 = vpop.f32.mrb[0].mxu0
    %894 = vmatprep.mubr.bf16.mxu0 0
    %895 = vmatmul.mubr.bf16.gmra.mrb[0].mxu0 %v719
    %v896 = vpop.f32.mrb[0].mxu0
    %v897 = vadd.f32 %v748, %v896
    %v898 = vpop.f32.mrb[0].mxu0
    %v899 = vpop.f32.mrb[0].mxu0
    %v900 = vadd.f32 %v748, %v899
    %v901 = vpop.f32.mrb[0].mxu0
    %902 = vmatprep.mubr.bf16.mxu0 0
    %903 = vmatmul.mubr.bf16.gmra.mrb[0].mxu0 %v720
    %v904 = vpop.f32.mrb[0].mxu0
    %v905 = vadd.f32 %v748, %v904
    %v906 = vpop.f32.mrb[0].mxu0
    %v907 = vpop.f32.mrb[0].mxu0
    %v908 = vadd.f32 %v748, %v907
    %v909 = vpop.f32.mrb[0].mxu0
    %910 = vmatprep.mubr.bf16.mxu0 0
    %911 = vmatmul.mubr.bf16.gmra.mrb[0].mxu0 %v721
    %v912 = vpop.f32.mrb[0].mxu0
    %v913 = vadd.f32 %v748, %v912
    %v914 = vpop.f32.mrb[0].mxu0
    %v915 = vpop.f32.mrb[0].mxu0
    %v916 = vadd.f32 %v748, %v915
    %v917 = vpop.f32.mrb[0].mxu0
    %918 = vmatprep.mubr.bf16.mxu0 0
    %919 = vmatmul.mubr.bf16.gmra.mrb[0].mxu0 %v722
    %v920 = vpop.f32.mrb[0].mxu0
    %v921 = vadd.f32 %v748, %v920
    %v922 = vpop.f32.mrb[0].mxu0
    %v923 = vpop.f32.mrb[0].mxu0
    %v924 = vadd.f32 %v748, %v923
    %v925 = vpop.f32.mrb[0].mxu0
    %926 = vmatprep.mubr.bf16.mxu0 0
    %927 = vmatmul.mubr.bf16.gmra.mrb[0].mxu0 %v723
    %v928 = vpop.f32.mrb[0].mxu0
    %v929 = vadd.f32 %v748, %v928
    %v930 = vpop.f32.mrb[0].mxu0
    %v931 = vpop.f32.mrb[0].mxu0
    %v932 = vadd.f32 %v748, %v931
    %v933 = vpop.f32.mrb[0].mxu0
    %934 = vmatprep.mubr.bf16.mxu0 0
    %935 = vmatmul.mubr.bf16.gmra.mrb[0].mxu0 %v724
    %v936 = vpop.f32.mrb[0].mxu0
    %v937 = vadd.f32 %v748, %v936
    %v938 = vpop.f32.mrb[0].mxu0
    %v939 = vpop.f32.mrb[0].mxu0
    %v940 = vadd.f32 %v748, %v939
    %v941 = vpop.f32.mrb[0].mxu0
    %942 = vmatprep.mubr.bf16.mxu0 0
    %943 = vmatmul.mubr.bf16.gmra.mrb[0].mxu0 %v725
    %v944 = vpop.f32.mrb[0].mxu0
    %v945 = vadd.f32 %v748, %v944
    %v946 = vpop.f32.mrb[0].mxu0
    %v947 = vpop.f32.mrb[0].mxu0
    %v948 = vadd.f32 %v748, %v947
    %v949 = vpop.f32.mrb[0].mxu0
    %950 = vmatprep.mubr.bf16.mxu0 0
    %951 = vmatmul.mubr.bf16.gmra.mrb[0].mxu0 %v726
    %v952 = vpop.f32.mrb[0].mxu0
    %v953 = vadd.f32 %v748, %v952
    %v954 = vpop.f32.mrb[0].mxu0
    %v955 = vpop.f32.mrb[0].mxu0
    %v956 = vadd.f32 %v748, %v955
    %v957 = vpop.f32.mrb[0].mxu0
    %958 = vdwg.mxu0
    %959 = vst [vmem:[#allocation8] sm:$0xff] %v833
    %960 = vst [vmem:[#allocation8 + $0x8] sm:$0xff] %v836
    %961 = vst [vmem:[#allocation8 + $0x10] sm:$0xff] %v841
    %962 = vst [vmem:[#allocation8 + $0x18] sm:$0xff] %v844
    %963 = vst [vmem:[#allocation8 + $0x20] sm:$0xff] %v849
    %964 = vst [vmem:[#allocation8 + $0x28] sm:$0xff] %v852
    %965 = vst [vmem:[#allocation8 + $0x30] sm:$0xff] %v857
    %966 = vst [vmem:[#allocation8 + $0x38] sm:$0xff] %v860
    %967 = vst [vmem:[#allocation8 + $0x40] sm:$0xff] %v865
    %968 = vst [vmem:[#allocation8 + $0x48] sm:$0xff] %v868
    %969 = vst [vmem:[#allocation8 + $0x50] sm:$0xff] %v873
    %970 = vst [vmem:[#allocation8 + $0x58] sm:$0xff] %v876
    %971 = vst [vmem:[#allocation8 + $0x60] sm:$0xff] %v881
    %972 = vst [vmem:[#allocation8 + $0x68] sm:$0xff] %v884
    %973 = vst [vmem:[#allocation8 + $0x70] sm:$0xff] %v889
    %974 = vst [vmem:[#allocation8 + $0x78] sm:$0xff] %v892
    %975 = vst [vmem:[#allocation8 + $0x80] sm:$0xff] %v897
    %976 = vst [vmem:[#allocation8 + $0x88] sm:$0xff] %v900
    %977 = vst [vmem:[#allocation8 + $0x90] sm:$0xff] %v905
    %978 = vst [vmem:[#allocation8 + $0x98] sm:$0xff] %v908
    %979 = vst [vmem:[#allocation8 + $0xa0] sm:$0xff] %v913
    %980 = vst [vmem:[#allocation8 + $0xa8] sm:$0xff] %v916
    %981 = vst [vmem:[#allocation8 + $0xb0] sm:$0xff] %v921
    %982 = vst [vmem:[#allocation8 + $0xb8] sm:$0xff] %v924
    %983 = vst [vmem:[#allocation8 + $0xc0] sm:$0xff] %v929
    %984 = vst [vmem:[#allocation8 + $0xc8] sm:$0xff] %v932
    %985 = vst [vmem:[#allocation8 + $0xd0] sm:$0xff] %v937
    %986 = vst [vmem:[#allocation8 + $0xd8] sm:$0xff] %v940
    %987 = vst [vmem:[#allocation8 + $0xe0] sm:$0xff] %v945
    %988 = vst [vmem:[#allocation8 + $0xe8] sm:$0xff] %v948
    %989 = vst [vmem:[#allocation8 + $0xf0] sm:$0xff] %v953
    %990 = vst [vmem:[#allocation8 + $0xf8] sm:$0xff] %v956
    // Predicated region
    $region34: #{tpu_custom_call.1} parent=1 // pred_check
      _
    $region35: #{tpu_custom_call.1} parent=1 // pred_check_branch
      %992 = sbr.rel (0) target = $region37
    $region36: #{tpu_custom_call.1} parent=1 // pred_region
      %s994 = ssub.s32 4096, 4096
      %995 = vsyncadd [#allocation4], %s994
      %s996 = sshll.u32 [#allocation8], 4
      %s997 = int_to_ptr.vmem [resolvable:$true] %s996
      %1002 = dma.vmem_to_hbm [thread:$0]  %s997, 4096, %s5, [#allocation4], 128, 128, 8
    $region37: #{tpu_custom_call.1} parent=1 // pred_fallthru
      _
    // Predicated region
    $region38: #{tpu_custom_call.1} parent=1 // pred_check
      _
    $region39: #{tpu_custom_call.1} parent=1 // pred_check_branch
      %1004 = sbr.rel (0) target = $region41
    $region40: #{tpu_custom_call.1} parent=1 // pred_region
      %1005 = dma.done [#allocation4], 4096
    $region41: #{tpu_custom_call.1} parent=1 // pred_fallthru
      _
    %1006 = vsyncpa [#allocation3], 1
    %1007 = vsyncpa [#allocation6], 1
    %1008 = vsyncpa [#allocation4], 1

</llo_original>
